<compile_context>
chip_gen: v7x
topology: tpu7x:2x2x1
jax: 0.10.0
libtpu: 0.0.40
codegen_flags: <defaults>
</compile_context>

<pallas_src>
import functools

import jax
import jax.numpy as jnp
from jax import lax
from jax.experimental import pallas as pl
from jax.experimental.pallas import tpu as pltpu


# ----------------------------------------------------------------------------
# Kernels
#   x_ref : (tile_s, B, Dp)   pe_ref : (tile_s, 1, Dp)   o_ref : (tile_s, B, Dp)
# ----------------------------------------------------------------------------
def _add_kernel(x_ref, pe_ref, o_ref):
    # pe broadcasts over the batch axis inside the kernel (no HBM broadcast).
    o_ref[...] = (x_ref[...] + pe_ref[...]).astype(o_ref.dtype)


def _add_dropout_kernel(seed_ref, x_ref, pe_ref, o_ref, *, threshold, scale,
                        block_elems):
    y = x_ref[...] + pe_ref[...]
    shp = y.shape

    # Global linear element index for this block (counter-based PRNG input).
    s_i = lax.broadcasted_iota(jnp.int32, shp, 0).astype(jnp.uint32)
    b_i = lax.broadcasted_iota(jnp.int32, shp, 1).astype(jnp.uint32)
    d_i = lax.broadcasted_iota(jnp.int32, shp, 2).astype(jnp.uint32)
    lin = (s_i * jnp.uint32(shp[1] * shp[2]) + b_i * jnp.uint32(shp[2]) + d_i
           + pl.program_id(0).astype(jnp.uint32) * jnp.uint32(block_elems))

    # lowbias32 hash, mixed with the seed -> tiling-independent keep mask.
    # TODO(synk): torch's dropout RNG stream cannot be bit-matched; only the
    # dropout semantics (zeros + 1/(1-p) scaling of kept entries) are kept.
    h = lin ^ (seed_ref[0].astype(jnp.uint32) * jnp.uint32(0x9E3779B9))
    h = h ^ (h >> jnp.uint32(16))
    h = h * jnp.uint32(0x7FEB352D)
    h = h ^ (h >> jnp.uint32(15))
    h = h * jnp.uint32(0x846CA68B)
    h = h ^ (h >> jnp.uint32(16))
    keep = h >= jnp.uint32(threshold)

    # Stay in the input dtype (bf16 VALU on v6e/v7x): no f32 constant promotion.
    factor = jnp.where(keep, jnp.array(scale, dtype=y.dtype),
                       jnp.array(0, dtype=y.dtype))
    o_ref[...] = (y * factor).astype(o_ref.dtype)


# ----------------------------------------------------------------------------
# Tiling helper
# ----------------------------------------------------------------------------
def _choose_tile_s(S, row_bytes):
    """Tile the sequence axis to ~4 MiB per x/out block (only x-in and out are
    streamed; double-buffered that is ~16 MiB live, within default scoped VMEM
    on v5e/v6e/v7x), while keeping >= ~4 grid steps when S allows so
    pipelining is active and both v7x TensorCores participate."""
    target_bytes = 4 * 1024 * 1024
    max_tile = max(1, target_bytes // row_bytes)
    tile = min(S, max_tile)
    if S >= 4:
        tile = min(tile, pl.cdiv(S, 4))
    return max(int(tile), 1)


# ----------------------------------------------------------------------------
# Wrapper
# ----------------------------------------------------------------------------
def learnable_positional_encoding(x, pe, *, dropout_p=0.1, training=False, seed=0):
    """x: [S, B, D], pe: [max_len, 1, D] -> [S, B, D]."""
    S, B, D = x.shape
    itemsize = jnp.dtype(x.dtype).itemsize

    p = float(dropout_p)
    if training and p >= 1.0:
        # Degenerate case: everything dropped (avoid inf scale / bad threshold).
        return jnp.zeros_like(x)

    pe_s = pe[:S].astype(x.dtype)  # [S, 1, D]; tiny, cast is free

    # Lane-dense layout: model dim on the lane axis.  If D % 128 != 0, pad D
    # up so every store is an unmasked full-width vst, slice the pad off after.
    Dp = D if D % 128 == 0 else ((D + 127) // 128) * 128
    if Dp != D:
        x_in = jnp.pad(x, ((0, 0), (0, 0), (0, Dp - D)))
        pe_in = jnp.pad(pe_s, ((0, 0), (0, 0), (0, Dp - D)))
    else:
        x_in, pe_in = x, pe_s

    row_bytes = B * Dp * itemsize
    tile_s = _choose_tile_s(S, row_bytes)
    grid = (pl.cdiv(S, tile_s),)

    total = S * B * Dp
    cost = pl.CostEstimate(
        flops=total, transcendentals=0,
        bytes_accessed=(2 * total + S * Dp) * itemsize,  # x read + out write + pe read
    )
    cparams = pltpu.CompilerParams(
        dimension_semantics=("parallel",),
        vmem_limit_bytes=32 * 1024 * 1024,
    )
    out_shape = jax.ShapeDtypeStruct((S, B, Dp), x.dtype)

    if (not training) or p == 0.0:
        out_p = pl.pallas_call(
            _add_kernel,
            out_shape=out_shape,
            grid_spec=pltpu.PrefetchScalarGridSpec(
                num_scalar_prefetch=0,
                grid=grid,
                in_specs=[
                    pl.BlockSpec((tile_s, B, Dp), lambda i: (i, 0, 0)),
                    pl.BlockSpec((tile_s, 1, Dp), lambda i: (i, 0, 0)),
                ],
                out_specs=pl.BlockSpec((tile_s, B, Dp), lambda i: (i, 0, 0)),
            ),
            compiler_params=cparams,
            cost_estimate=cost,
        )(x_in, pe_in)
    else:
        threshold = min(int(round(p * (1 << 32))), (1 << 32) - 1)
        scale = 1.0 / (1.0 - p)
        kernel = functools.partial(
            _add_dropout_kernel,
            threshold=threshold, scale=scale, block_elems=tile_s * B * Dp,
        )
        seed_arr = jnp.array([seed], dtype=jnp.int32)
        out_p = pl.pallas_call(
            kernel,
            out_shape=out_shape,
            grid_spec=pltpu.PrefetchScalarGridSpec(
                num_scalar_prefetch=1,
                grid=grid,
                in_specs=[
                    pl.BlockSpec((tile_s, B, Dp), lambda i, s: (i, 0, 0)),
                    pl.BlockSpec((tile_s, 1, Dp), lambda i, s: (i, 0, 0)),
                ],
                out_specs=pl.BlockSpec((tile_s, B, Dp), lambda i, s: (i, 0, 0)),
            ),
            compiler_params=cparams,
            cost_estimate=cost,
        )(seed_arr, x_in, pe_in)

    if Dp != D:
        out_p = out_p[:, :, :D]
    return out_p


# ----------------------------------------------------------------------------
# Main
# ----------------------------------------------------------------------------
if __name__ == "__main__":
    # Module hyper-params (small shapes consistent with the module's forward)
    d_model = 32
    max_len = 64
    seq_len = 8
    batch = 2

    key = jax.random.PRNGKey(0)
    kx, kpe = jax.random.split(key)

    # Parameter init: nn.init.uniform_(pe, -0.02, 0.02)
    pe = jax.random.uniform(
        kpe, (max_len, 1, d_model), dtype=jnp.float32, minval=-0.02, maxval=0.02
    )
    # Input x: [S, B, D]
    x = jax.random.normal(kx, (seq_len, batch, d_model), dtype=jnp.float32)

    # Eval-mode forward (dropout == identity)
    out = learnable_positional_encoding(x, pe, dropout_p=0.1, training=False)
    out = jax.block_until_ready(out)

    ref = x + pe[:seq_len]
    assert out.shape == (seq_len, batch, d_model)
    assert out.dtype == x.dtype
    assert jnp.allclose(out, ref, atol=1e-6, rtol=1e-6)

    # Training-mode forward — check dropout semantics (zeros + 1/(1-p) scaling),
    # not torch's RNG stream.
    out_tr = learnable_positional_encoding(
        x, pe, dropout_p=0.1, training=True, seed=123
    )
    out_tr = jax.block_until_ready(out_tr)
    assert out_tr.shape == (seq_len, batch, d_model)
    kept = out_tr != 0
    assert jnp.allclose(
        jnp.where(kept, out_tr, 0.0),
        jnp.where(kept, ref / 0.9, 0.0),
        atol=1e-5,
        rtol=1e-5,
    )

    print("KERNEL_OK")
</pallas_src>

<mosaic_0001>
module attributes {stable_mosaic.version = 11 : i64} {
  func.func @_add_kernel(%arg0: i32, %arg1: memref<2x2x128xf32, #tpu.memory_space<vmem>>, %arg2: memref<2x1x128xf32, #tpu.memory_space<vmem>>, %arg3: memref<2x2x128xf32, #tpu.memory_space<vmem>>) attributes {dimension_semantics = [#tpu.dimension_semantics<parallel>], iteration_bounds = array<i64: 4>, scalar_prefetch = 0 : i64, scratch_operands = 0 : i64, tpu.core_type = #tpu.core_type<tc>, window_params = [{transform_indices = @transform_0, window_bounds = array<i64: 2, 2, 128>}, {transform_indices = @transform_1, window_bounds = array<i64: 2, 1, 128>}, {transform_indices = @transform_2, window_bounds = array<i64: 2, 2, 128>}]} {
    %c0 = arith.constant 0 : index
    %c0_0 = arith.constant 0 : index
    %c0_1 = arith.constant 0 : index
    %0 = vector.load %arg1[%c0, %c0_0, %c0_1] : memref<2x2x128xf32, #tpu.memory_space<vmem>>, vector<2x2x128xf32>
    %c0_2 = arith.constant 0 : index
    %c0_3 = arith.constant 0 : index
    %c0_4 = arith.constant 0 : index
    %1 = vector.load %arg2[%c0_2, %c0_3, %c0_4] : memref<2x1x128xf32, #tpu.memory_space<vmem>>, vector<2x1x128xf32>
    %2 = vector.broadcast %1 : vector<2x1x128xf32> to vector<2x2x128xf32>
    %3 = arith.addf %0, %2 : vector<2x2x128xf32>
    %c0_5 = arith.constant 0 : index
    %c0_6 = arith.constant 0 : index
    %c0_7 = arith.constant 0 : index
    %4 = vector.load %arg3[%c0_5, %c0_6, %c0_7] : memref<2x2x128xf32, #tpu.memory_space<vmem>>, vector<2x2x128xf32>
    tpu.vector_store %arg3[%c0_5, %c0_6, %c0_7], %3 {strides = array<i32>} : memref<2x2x128xf32, #tpu.memory_space<vmem>>, vector<2x2x128xf32>,
    return
  }
  func.func @transform_0(%arg0: i32) -> (i32, i32, i32) {
    %c0_i32 = arith.constant 0 : i32
    %c0_i32_0 = arith.constant 0 : i32
    %c0_i32_1 = arith.constant 0 : i32
    return %arg0, %c0_i32, %c0_i32_0 : i32, i32, i32
  }
  func.func @transform_1(%arg0: i32) -> (i32, i32, i32) {
    %c0_i32 = arith.constant 0 : i32
    %c0_i32_0 = arith.constant 0 : i32
    %c0_i32_1 = arith.constant 0 : i32
    return %arg0, %c0_i32, %c0_i32_0 : i32, i32, i32
  }
  func.func @transform_2(%arg0: i32) -> (i32, i32, i32) {
    %c0_i32 = arith.constant 0 : i32
    %c0_i32_0 = arith.constant 0 : i32
    %c0_i32_1 = arith.constant 0 : i32
    return %arg0, %c0_i32, %c0_i32_0 : i32, i32, i32
  }
}

</mosaic_0001>

<llo_original>
// kernel: tpu_custom_call.1
$region0: #{tpu_custom_call.1}
  #allocation0 [shape = 'u32[]', space=smem, size = 0x4, offset = 0x4, fixed_abs, tag = 'smem constant byte address 0x4 - core index']
  #allocation1 [shape = 'u32[144,128]{1,0:T(1,128)}', space=vmem, size = 0x12000, scoped, tag = 'internal scratch']
  %s0 = inlined_call_operand.hbm [shape: f32[8,2,128], index: 0, kind: input, shape index: {}]
  %s1 = inlined_call_operand.hbm [shape: f32[8,1,128], index: 1, kind: input, shape index: {}]
  %s2 = inlined_call_operand.hbm [shape: f32[8,2,128], index: 2, kind: output, shape index: {}]
  %s3 = sld [smem:[#allocation0]]
  $region49: #{tpu_custom_call.1} parent=0
    _
  %s5 = ssub.s32 1, %s3
  %s6 = scalar_select 0, %s5, %s3
  $region1: #{tpu_custom_call.1} parent=0
    #allocation2 [shape = 'u8[4096]{0}', space=vmem, size = 0x1000, scoped, tag = 'input window, operand 0']
    #allocation3 [shape = 's32[2]{0}', space=sflag, size = 0x8, scoped, tag = 'scoped memory for tpu_custom_call.1']
    #allocation4 [shape = 's32[2]{0}', space=sflag, size = 0x8, scoped, tag = 'scoped memory for tpu_custom_call.1']
    #allocation5 [shape = 'u8[2048]{0}', space=vmem, size = 0x800, scoped, tag = 'input window, operand 1']
    #allocation6 [shape = 's32[2]{0}', space=sflag, size = 0x8, scoped, tag = 'scoped memory for tpu_custom_call.1']
    #allocation7 [shape = 'u8[4096]{0}', space=vmem, size = 0x1000, scoped, tag = 'output window, operand 0']
    %7 = vsyncpa [#allocation3], 0
    %s8 = scalar_lea.sflag [#allocation3], 1
    %9 = vsyncpa %s8, 0
    %10 = vsyncpa [#allocation6], 0
    %s11 = scalar_lea.sflag [#allocation6], 1
    %12 = vsyncpa %s11, 0
    %13 = vsyncpa [#allocation4], 0
    %s14 = scalar_lea.sflag [#allocation4], 1
    %15 = vsyncpa %s14, 0
    loop: start=0, step=1, limit=6
    $region2: #{tpu_custom_call.1} parent=1 // loop_pre_header
      _
    $region3: #{tpu_custom_call.1} parent=1 // loop_header
      %s17 = sphi 0, %s21
      %p18 = scmp.ge.s32.totalorder %s17, 6
      %s27 = sphi 0, %s29
      %s30 = sphi 0, %s27
      %s31 = sphi 0, %s30
      %s47 = sphi 0, %s31
      %s53 = sphi 0, %s55
      %s56 = sphi 0, %s53
      %s57 = sphi 0, %s56
      %s73 = sphi 0, %s57
      %s79 = sphi 0, %s81
      %s82 = sphi 0, %s79
      %s83 = sphi 0, %s82
      %s99 = sphi 0, %s83
    $region4: #{tpu_custom_call.1} parent=1 // loop_header_branch
      %20 = sbr.rel (%p18) target = $region8
    $region5: #{tpu_custom_call.1} parent=1 // loop_body
      %s22 = ssub.s32 %s17, 1
      %s23 = ssub.s32 %s17, 2
      %s24 = sadd.s32 %s17, 1
      %s25 = ssub.s32 %s17, %s24
      %p26 = scmp.eq.s32.totalorder %s25, 0
      %s28 = sadd.s32 %s27, 1
      %s29 = scalar_select %p26, %s27, %s28
      %p32 = pneg %p26
      %p33 = scmp.eq.s32.totalorder %s17, 3
      %p34 = por %p32, %p33
      %p35 = scmp.ne.s32.totalorder %s27, %s30
      %p36 = scmp.eq.s32.totalorder %s17, 0
      %p37 = por %p35, %p36
      %p38 = scmp.ne.s32.totalorder %s27, %s30
      %p39 = scmp.eq.s32.totalorder %s22, 3
      %p40 = por %p38, %p39
      %p41 = scmp.ne.s32.totalorder %s30, %s31
      %p42 = scmp.eq.s32.totalorder %s22, 0
      %p43 = por %p41, %p42
      %p44 = scmp.ne.s32.totalorder %s30, %s31
      %p45 = scmp.eq.s32.totalorder %s23, 3
      %p46 = por %p44, %p45
      %p48 = scmp.ne.s32.totalorder %s31, %s47
      %p49 = scmp.eq.s32.totalorder %s23, 0
      %p50 = por %p48, %p49
      %s51 = ssub.s32 %s17, %s24
      %p52 = scmp.eq.s32.totalorder %s51, 0
      %s54 = sadd.s32 %s53, 1
      %s55 = scalar_select %p52, %s53, %s54
      %p58 = pneg %p52
      %p59 = scmp.eq.s32.totalorder %s17, 3
      %p60 = por %p58, %p59
      %p61 = scmp.ne.s32.totalorder %s53, %s56
      %p62 = scmp.eq.s32.totalorder %s17, 0
      %p63 = por %p61, %p62
      %p64 = scmp.ne.s32.totalorder %s53, %s56
      %p65 = scmp.eq.s32.totalorder %s22, 3
      %p66 = por %p64, %p65
      %p67 = scmp.ne.s32.totalorder %s56, %s57
      %p68 = scmp.eq.s32.totalorder %s22, 0
      %p69 = por %p67, %p68
      %p70 = scmp.ne.s32.totalorder %s56, %s57
      %p71 = scmp.eq.s32.totalorder %s23, 3
      %p72 = por %p70, %p71
      %p74 = scmp.ne.s32.totalorder %s57, %s73
      %p75 = scmp.eq.s32.totalorder %s23, 0
      %p76 = por %p74, %p75
      %s77 = ssub.s32 %s17, %s24
      %p78 = scmp.eq.s32.totalorder %s77, 0
      %s80 = sadd.s32 %s79, 1
      %s81 = scalar_select %p78, %s79, %s80
      %p84 = pneg %p78
      %p85 = scmp.eq.s32.totalorder %s17, 3
      %p86 = por %p84, %p85
      %p87 = scmp.ne.s32.totalorder %s79, %s82
      %p88 = scmp.eq.s32.totalorder %s17, 0
      %p89 = por %p87, %p88
      %p90 = scmp.ne.s32.totalorder %s79, %s82
      %p91 = scmp.eq.s32.totalorder %s22, 3
      %p92 = por %p90, %p91
      %p93 = scmp.ne.s32.totalorder %s82, %s83
      %p94 = scmp.eq.s32.totalorder %s22, 0
      %p95 = por %p93, %p94
      %p96 = scmp.ne.s32.totalorder %s82, %s83
      %p97 = scmp.eq.s32.totalorder %s23, 3
      %p98 = por %p96, %p97
      %p100 = scmp.ne.s32.totalorder %s83, %s99
      %p101 = scmp.eq.s32.totalorder %s23, 0
      %p102 = por %p100, %p101
      %p103 = scmp.le.s32.totalorder 1, %s17
      %p104 = scmp.lt.s32.totalorder %s17, 5
      %p105 = pnand %p103, %p104
      %p106 = pneg %p105
      // Predicated region
      $region9: #{tpu_custom_call.1} parent=5 // pred_check
        _
      $region10: #{tpu_custom_call.1} parent=5 // pred_check_branch
        %108 = sbr.rel (%p105) target = $region12
      $region11: #{tpu_custom_call.1} parent=5 // pred_region
        %s109 = ssub.s32 %s17, 1
      $region12: #{tpu_custom_call.1} parent=5 // pred_fallthru
        _
      %p110 = scmp.lt.s32.totalorder %s17, 4
      // Predicated region
      $region13: #{tpu_custom_call.1} parent=5 // pred_check
        %p111 = pneg %p110
      $region14: #{tpu_custom_call.1} parent=5 // pred_check_branch
        %113 = sbr.rel (%p111) target = $region16
      $region15: #{tpu_custom_call.1} parent=5 // pred_region
        // Predicated region
        $region17: #{tpu_custom_call.1} parent=15 // pred_check
          %p114 = pneg %p37
        $region18: #{tpu_custom_call.1} parent=15 // pred_check_branch
          %116 = sbr.rel (%p114) target = $region20
        $region19: #{tpu_custom_call.1} parent=15 // pred_region
          %s117 = sand.u32 %s27, 1
          %s118 = scalar_lea.sflag [#allocation3], %s117
          %s119 = sand.u32 %s27, 1
          %s120 = smul.addr %s119, 4
          %s121 = scalar_lea.vmem [#allocation2], %s120
          %s122 = smul.u32 2, %s17
          %s124 = ssub.s32 64, 64
          %125 = vsyncadd %s118, %s124
          %s126 = smul.addr %s122, 32
          %s127 = scalar_lea.hbm %s0, %s126
          %s128 = sshll.u32 %s121, 4
          %s129 = int_to_ptr.vmem [resolvable:$true] %s128
          %134 = dma.hbm_to_vmem [thread:$0]  %s127, 64, %s129, %s118, 32, 32, 2
        $region20: #{tpu_custom_call.1} parent=15 // pred_fallthru
          _
        // Predicated region
        $region21: #{tpu_custom_call.1} parent=15 // pred_check
          %p135 = pneg %p63
        $region22: #{tpu_custom_call.1} parent=15 // pred_check_branch
          %137 = sbr.rel (%p135) target = $region24
        $region23: #{tpu_custom_call.1} parent=15 // pred_region
          %s138 = sand.u32 %s53, 1
          %s139 = scalar_lea.sflag [#allocation6], %s138
          %s140 = sand.u32 %s53, 1
          %s141 = smul.addr %s140, 2
          %s142 = scalar_lea.vmem [#allocation5], %s141
          %s143 = smul.u32 2, %s17
          %s145 = ssub.s32 32, 32
          %146 = vsyncadd %s139, %s145
          %s147 = smul.addr %s143, 16
          %s148 = scalar_lea.hbm %s1, %s147
          %s149 = sshll.u32 %s142, 4
          %s150 = int_to_ptr.vmem [resolvable:$true] %s149
          %155 = dma.hbm_to_vmem [thread:$0]  %s148, 32, %s150, %s139, 16, 16, 1
        $region24: #{tpu_custom_call.1} parent=15 // pred_fallthru
          _
      $region16: #{tpu_custom_call.1} parent=5 // pred_fallthru
        _
      %p156 = scmp.le.s32.totalorder 1, %s17
      %p157 = scmp.lt.s32.totalorder %s17, 5
      %p158 = pnand %p156, %p157
      %p159 = pneg %p158
      // Predicated region
      $region25: #{tpu_custom_call.1} parent=5 // pred_check
        _
      $region26: #{tpu_custom_call.1} parent=5 // pred_check_branch
        %161 = sbr.rel (%p158) target = $region28
      $region27: #{tpu_custom_call.1} parent=5 // pred_region
        %s162 = ssub.s32 %s17, 1
        %s163 = sand.u32 %s30, 1
        %s164 = scalar_lea.sflag [#allocation3], %s163
        %s165 = sand.u32 %s30, 1
        %s166 = smul.addr %s165, 4
        %s167 = scalar_lea.vmem [#allocation2], %s166
        // Predicated region
        $region29: #{tpu_custom_call.1} parent=27 // pred_check
          %p168 = pneg %p43
        $region30: #{tpu_custom_call.1} parent=27 // pred_check_branch
          %170 = sbr.rel (%p168) target = $region32
        $region31: #{tpu_custom_call.1} parent=27 // pred_region
          %171 = dma.done %s164, 64
        $region32: #{tpu_custom_call.1} parent=27 // pred_fallthru
          _
        %s172 = sand.u32 %s56, 1
        %s173 = scalar_lea.sflag [#allocation6], %s172
        %s174 = sand.u32 %s56, 1
        %s175 = smul.addr %s174, 2
        %s176 = scalar_lea.vmem [#allocation5], %s175
        // Predicated region
        $region33: #{tpu_custom_call.1} parent=27 // pred_check
          %p177 = pneg %p69
        $region34: #{tpu_custom_call.1} parent=27 // pred_check_branch
          %179 = sbr.rel (%p177) target = $region36
        $region35: #{tpu_custom_call.1} parent=27 // pred_region
          %180 = dma.done %s173, 32
        $region36: #{tpu_custom_call.1} parent=27 // pred_fallthru
          _
        %s181 = sand.u32 %s30, 1
        %s182 = scalar_lea.sflag [#allocation3], %s181
        %s183 = sand.u32 %s30, 1
        %s184 = smul.addr %s183, 4
        %s185 = scalar_lea.vmem [#allocation2], %s184
        %p186 = pneg %p43
        %p187 = pneg %p40
        %s188 = sand.u32 %s56, 1
        %s189 = scalar_lea.sflag [#allocation6], %s188
        %s190 = sand.u32 %s56, 1
        %s191 = smul.addr %s190, 2
        %s192 = scalar_lea.vmem [#allocation5], %s191
        %p193 = pneg %p69
        %p194 = pneg %p66
        %p195 = pneg %p95
        %p196 = pneg %p92
        %s197 = sand.u32 %s82, 1
        %s198 = scalar_lea.sflag [#allocation4], %s197
        %s199 = sand.u32 %s82, 1
        %s200 = smul.addr %s199, 4
        %s201 = scalar_lea.vmem [#allocation7], %s200
        %s202 = smul.u32 2, %s22
        %s203 = smul.u32 2, %s22
        %s204 = smul.u32 2, %s22
        %v205 = vld [vmem:[%s167] sm:$0x3]
        %v206 = vld [vmem:[%s167 + $0x2] sm:$0x3]
        %v207 = vld [vmem:[%s176] sm:$0x1]
        %v208 = vld [vmem:[%s176 + $0x1] sm:$0x1]
        %v211 = vlaneseq
        %v212 = vshrl.u32 %v211, 7
        %v213 = vsub.s32 0, %v212
        %v214 = vrot.slane %v207, %v213
        %v215 = vlaneseq
        %v216 = vshrl.u32 %v215, 7
        %v217 = vsub.s32 0, %v216
        %v218 = vrot.slane %v208, %v217
        %v221 = vadd.f32 %v205, %v214
        %v222 = vadd.f32 %v206, %v218
        %223 = vst [vmem:[%s201] sm:$0x3] %v221
        %224 = vst [vmem:[%s201 + $0x2] sm:$0x3] %v222
        %s225 = sand.u32 %s82, 1
        %s226 = scalar_lea.sflag [#allocation4], %s225
        %s227 = sand.u32 %s82, 1
        %s228 = smul.addr %s227, 4
        %s229 = scalar_lea.vmem [#allocation7], %s228
        // Predicated region
        $region37: #{tpu_custom_call.1} parent=27 // pred_check
          %p230 = pneg %p92
        $region38: #{tpu_custom_call.1} parent=27 // pred_check_branch
          %232 = sbr.rel (%p230) target = $region40
        $region39: #{tpu_custom_call.1} parent=27 // pred_region
          %s233 = smul.u32 2, %s22
          %s235 = ssub.s32 64, 64
          %236 = vsyncadd %s226, %s235
          %s237 = smul.addr %s233, 32
          %s238 = scalar_lea.hbm %s2, %s237
          %s239 = sshll.u32 %s229, 4
          %s240 = int_to_ptr.vmem [resolvable:$true] %s239
          %245 = dma.vmem_to_hbm [thread:$0]  %s240, 64, %s238, %s226, 32, 32, 2
        $region40: #{tpu_custom_call.1} parent=27 // pred_fallthru
          _
      $region28: #{tpu_custom_call.1} parent=5 // pred_fallthru
        _
      %p246 = scmp.le.s32.totalorder 2, %s17
      // Predicated region
      $region41: #{tpu_custom_call.1} parent=5 // pred_check
        %p247 = pneg %p246
      $region42: #{tpu_custom_call.1} parent=5 // pred_check_branch
        %249 = sbr.rel (%p247) target = $region44
      $region43: #{tpu_custom_call.1} parent=5 // pred_region
        %s250 = ssub.s32 %s17, 2
        // Predicated region
        $region45: #{tpu_custom_call.1} parent=43 // pred_check
          %p251 = pneg %p98
        $region46: #{tpu_custom_call.1} parent=43 // pred_check_branch
          %253 = sbr.rel (%p251) target = $region48
        $region47: #{tpu_custom_call.1} parent=43 // pred_region
          %s254 = sand.u32 %s83, 1
          %s255 = scalar_lea.sflag [#allocation4], %s254
          %s256 = sand.u32 %s83, 1
          %s257 = smul.addr %s256, 4
          %s258 = scalar_lea.vmem [#allocation7], %s257
          %259 = dma.done %s255, 64
        $region48: #{tpu_custom_call.1} parent=43 // pred_fallthru
          _
      $region44: #{tpu_custom_call.1} parent=5 // pred_fallthru
        _
    $region6: #{tpu_custom_call.1} parent=1 // loop_footer
      %s21 = sadd.s32 1, %s17
    $region7: #{tpu_custom_call.1} parent=1 // loop_footer_branch
      %16 = sbr.rel target = $region3
    $region8: #{tpu_custom_call.1} parent=1 // loop_exit
      _
    %260 = vsyncpa [#allocation3], 1
    %s261 = scalar_lea.sflag [#allocation3], 1
    %262 = vsyncpa %s261, 1
    %263 = vsyncpa [#allocation6], 1
    %s264 = scalar_lea.sflag [#allocation6], 1
    %265 = vsyncpa %s264, 1
    %266 = vsyncpa [#allocation4], 1
    %s267 = scalar_lea.sflag [#allocation4], 1
    %268 = vsyncpa %s267, 1

</llo_original>
